<compile_context>
chip_gen: v7x
topology: tpu7x:2x2x1
jax: 0.10.0
libtpu: 0.0.40
codegen_flags: <defaults>
</compile_context>

<pallas_src>
import math
import jax
import jax.numpy as jnp
from jax.experimental import pallas as pl
from jax.experimental.pallas import tpu as pltpu

_INV_SQRT2 = 1.0 / math.sqrt(2.0)
_LN_EPS = 1e-5


def _round_up(x, m):
    return ((x + m - 1) // m) * m


def _adapter_kernel(x_ref, wd_ref, bd_ref, wu_ref, bu_ref, g_ref, beta_ref, o_ref):
    # Residual / LayerNorm path always in f32 regardless of I/O dtype.
    x = x_ref[...].astype(jnp.float32)

    # Down projection (MXU), f32 operands + f32 accumulation.
    h = jnp.dot(x, wd_ref[...], preferred_element_type=jnp.float32) + bd_ref[...]

    # Exact (erf-based) GELU, matching torch.nn.functional.gelu default.
    h = 0.5 * h * (1.0 + jax.lax.erf(h * _INV_SQRT2))

    # Up projection (MXU).
    u = jnp.dot(h, wu_ref[...], preferred_element_type=jnp.float32) + bu_ref[...]

    # Dropout: eval-mode identity (p=0.1 only active in training).
    # TODO(synk): training-mode dropout would need pltpu.prng_seed / prng_random_bits masking.
    y = x + u

    # Single-pass LayerNorm statistics over the hidden dim: var = E[y^2] - mean^2.
    inv_h = 1.0 / y.shape[-1]
    mean = jnp.sum(y, axis=-1, keepdims=True) * inv_h
    ex2 = jnp.sum(y * y, axis=-1, keepdims=True) * inv_h
    var = ex2 - mean * mean
    y_hat = (y - mean) * jax.lax.rsqrt(var + _LN_EPS)
    o_ref[...] = (y_hat * g_ref[...] + beta_ref[...]).astype(o_ref.dtype)


def _choose_row_tile(n_rows, hidden, bottleneck, act_itemsize, vmem_usable, row_tile_cap):
    """Pick the largest 8-aligned row tile that fits the VMEM budget and keeps >=2 blocks."""
    # Per-row VMEM: double-buffered in + out tiles (activation dtype) + ~4 live f32 (tm, H)
    # temporaries inside the body + small (tm, Bn) intermediates.
    per_row = 4 * hidden * act_itemsize + 4 * hidden * 4 + 3 * bottleneck * 4
    tm = max(vmem_usable // max(per_row, 1), 8)
    tm = (tm // 8) * 8
    tm = min(tm, row_tile_cap)
    # Keep >= 2 grid blocks so the "parallel" axis can feed both v7x TensorCores.
    tm = min(tm, _round_up(pl.cdiv(n_rows, 2), 8))
    tm = min(tm, _round_up(n_rows, 8))
    return max(tm, 8)


def simple_adapter_forward(hidden_states, params, *, row_tile_cap=1024):
    """hidden_states: [batch, seq, hidden], float32 or bfloat16."""
    B, S, H = hidden_states.shape
    N = B * S
    x2d = hidden_states.reshape(N, H)

    wd, bd = params["down_w"], params["down_b"]      # (H, Bn), (1, Bn)
    wu, bu = params["up_w"], params["up_b"]          # (Bn, H), (1, H)
    g, beta = params["ln_w"], params["ln_b"]         # (1, H),  (1, H)
    Bn = wd.shape[1]

    # --- VMEM budgeting (explicit, per-generation via hardware query) -------------------
    try:
        vmem_cap = int(pltpu.get_tpu_info().vmem_capacity_bytes)
    except Exception:
        vmem_cap = 64 * 1024 * 1024  # conservative: v7x per-core VMEM
    vmem_limit = min(int(0.75 * vmem_cap), 96 * 1024 * 1024)

    weight_bytes = (2 * H * Bn + Bn + 3 * H) * 4
    usable = max(int(0.8 * vmem_limit) - 2 * weight_bytes, 1 << 20)
    tm = _choose_row_tile(N, H, Bn, x2d.dtype.itemsize, usable, row_tile_cap)
    grid = (pl.cdiv(N, tm),)  # no padding: Pallas masks the boundary block's stores

    def call(single_buffer_weights):
        const_kw = {}
        if single_buffer_weights:
            # Loop-invariant operands: single buffer (index_map is constant, no re-DMA).
            const_kw = dict(pipeline_mode=pl.Buffered(1))

        def const_spec(shape):
            return pl.BlockSpec(shape, lambda i: (0, 0), **const_kw)

        return pl.pallas_call(
            _adapter_kernel,
            out_shape=jax.ShapeDtypeStruct((N, H), hidden_states.dtype),
            grid_spec=pltpu.PrefetchScalarGridSpec(
                num_scalar_prefetch=0,
                grid=grid,
                in_specs=[
                    pl.BlockSpec((tm, H), lambda i: (i, 0)),   # activation rows
                    const_spec((H, Bn)),                       # down weight (resident)
                    const_spec((1, Bn)),                       # down bias
                    const_spec((Bn, H)),                       # up weight (resident)
                    const_spec((1, H)),                        # up bias
                    const_spec((1, H)),                        # LayerNorm gamma
                    const_spec((1, H)),                        # LayerNorm beta
                ],
                out_specs=pl.BlockSpec((tm, H), lambda i: (i, 0)),
            ),
            compiler_params=pltpu.CompilerParams(
                dimension_semantics=("parallel",),
                vmem_limit_bytes=vmem_limit,
            ),
        )(x2d, wd, bd, wu, bu, g, beta)

    try:
        out2d = call(True)
    except Exception:
        # Compatibility fallback: pipeline_mode=pl.Buffered(1) not supported on this JAX
        # version for the implicit pallas_call pipeline; costs one extra buffer per weight.
        out2d = call(False)

    return out2d.reshape(B, S, H)


def init_params(key, hidden_size, bottleneck_size=64, adapter_init_scale=0.001):
    k1, k2 = jax.random.split(key)
    # torch Linear.weight is (out, in); the kernel uses the transposed (in, out) layout.
    down_w_t = (adapter_init_scale *
                jax.random.normal(k1, (bottleneck_size, hidden_size), jnp.float32)).T
    up_w_t = (adapter_init_scale *
              jax.random.normal(k2, (hidden_size, bottleneck_size), jnp.float32)).T
    return {
        "down_w": down_w_t,
        "down_b": jnp.zeros((1, bottleneck_size), jnp.float32),
        "up_w": up_w_t,
        "up_b": jnp.zeros((1, hidden_size), jnp.float32),
        "ln_w": jnp.ones((1, hidden_size), jnp.float32),
        "ln_b": jnp.zeros((1, hidden_size), jnp.float32),
    }


def _reference(hidden_states, params):
    """Pure-JAX f32 reference for sanity checking."""
    x = hidden_states
    h = x @ params["down_w"] + params["down_b"][0]
    h = 0.5 * h * (1.0 + jax.lax.erf(h * _INV_SQRT2))
    u = h @ params["up_w"] + params["up_b"][0]
    y = x + u
    mean = jnp.mean(y, -1, keepdims=True)
    var = jnp.mean((y - mean) ** 2, -1, keepdims=True)
    return (y - mean) * jax.lax.rsqrt(var + _LN_EPS) * params["ln_w"][0] + params["ln_b"][0]


if __name__ == "__main__":
    key = jax.random.PRNGKey(0)
    k_param, k_x1, k_x2 = jax.random.split(key, 3)

    hidden, bottleneck = 32, 64
    params = init_params(k_param, hidden, bottleneck)

    # case 1: small shape from the module spec (row count divisible by the tile)
    x1 = jax.random.normal(k_x1, (2, 8, hidden), jnp.float32)
    out1 = jax.block_until_ready(simple_adapter_forward(x1, params))
    ref1 = _reference(x1, params)
    assert jnp.allclose(out1, ref1, atol=2e-3, rtol=2e-3), "mismatch vs reference (case 1)"

    # case 2: row count not a multiple of the tile -> exercises masked boundary blocks
    # (no jnp.pad / output slicing anywhere in the wrapper)
    x2 = jax.random.normal(k_x2, (3, 5, hidden), jnp.float32)
    out2 = jax.block_until_ready(simple_adapter_forward(x2, params))
    ref2 = _reference(x2, params)
    assert jnp.allclose(out2, ref2, atol=2e-3, rtol=2e-3), "mismatch vs reference (case 2)"

    # case 3: bf16 activation I/O (halves HBM traffic; internal math stays f32)
    x3 = x1.astype(jnp.bfloat16)
    out3 = jax.block_until_ready(simple_adapter_forward(x3, params))
    ref3 = _reference(x3.astype(jnp.float32), params)
    assert jnp.allclose(out3.astype(jnp.float32), ref3, atol=3e-2, rtol=3e-2), \
        "mismatch vs reference (case 3, bf16 I/O)"

    print("KERNEL_OK")
</pallas_src>

<mosaic_0001>
module attributes {stable_mosaic.version = 11 : i64} {
  func.func @_adapter_kernel(%arg0: i32, %arg1: memref<8x32xf32, #tpu.memory_space<vmem>>, %arg2: memref<32x64xf32, #tpu.memory_space<vmem>>, %arg3: memref<1x64xf32, #tpu.memory_space<vmem>>, %arg4: memref<64x32xf32, #tpu.memory_space<vmem>>, %arg5: memref<1x32xf32, #tpu.memory_space<vmem>>, %arg6: memref<1x32xf32, #tpu.memory_space<vmem>>, %arg7: memref<1x32xf32, #tpu.memory_space<vmem>>, %arg8: memref<8x32xf32, #tpu.memory_space<vmem>>) attributes {dimension_semantics = [#tpu.dimension_semantics<parallel>], iteration_bounds = array<i64: 2>, scalar_prefetch = 0 : i64, scratch_operands = 0 : i64, tpu.core_type = #tpu.core_type<tc>, window_params = [{transform_indices = @transform_0, window_bounds = array<i64: 8, 32>}, {pipeline_mode = #tpu.pipeline_mode<synchronous>, transform_indices = @transform_1, window_bounds = array<i64: 32, 64>}, {pipeline_mode = #tpu.pipeline_mode<synchronous>, transform_indices = @transform_2, window_bounds = array<i64: 1, 64>}, {pipeline_mode = #tpu.pipeline_mode<synchronous>, transform_indices = @transform_3, window_bounds = array<i64: 64, 32>}, {pipeline_mode = #tpu.pipeline_mode<synchronous>, transform_indices = @transform_4, window_bounds = array<i64: 1, 32>}, {pipeline_mode = #tpu.pipeline_mode<synchronous>, transform_indices = @transform_5, window_bounds = array<i64: 1, 32>}, {pipeline_mode = #tpu.pipeline_mode<synchronous>, transform_indices = @transform_6, window_bounds = array<i64: 1, 32>}, {transform_indices = @transform_7, window_bounds = array<i64: 8, 32>}]} {
    %c0 = arith.constant 0 : index
    %c0_0 = arith.constant 0 : index
    %0 = vector.load %arg1[%c0, %c0_0] : memref<8x32xf32, #tpu.memory_space<vmem>>, vector<8x32xf32>
    %c0_1 = arith.constant 0 : index
    %c0_2 = arith.constant 0 : index
    %1 = vector.load %arg2[%c0_1, %c0_2] : memref<32x64xf32, #tpu.memory_space<vmem>>, vector<32x64xf32>
    %cst = arith.constant dense<0.000000e+00> : vector<8x64xf32>
    %2 = tpu.matmul %0, %1, %cst {dimension_numbers = #tpu.dot_dimension_numbers<[1], [0], [0], [1], [0, 0, 1, 1], [], []>} : vector<8x32xf32>, vector<32x64xf32>, vector<8x64xf32> -> vector<8x64xf32>
    %c0_3 = arith.constant 0 : index
    %c0_4 = arith.constant 0 : index
    %3 = vector.load %arg3[%c0_3, %c0_4] : memref<1x64xf32, #tpu.memory_space<vmem>>, vector<1x64xf32>
    %4 = vector.broadcast %3 : vector<1x64xf32> to vector<8x64xf32>
    %5 = arith.addf %2, %4 : vector<8x64xf32>
    %cst_5 = arith.constant 5.000000e-01 : f32
    %6 = vector.broadcast %cst_5 : f32 to vector<8x64xf32>
    %7 = arith.mulf %6, %5 : vector<8x64xf32>
    %cst_6 = arith.constant 0.707106769 : f32
    %8 = vector.broadcast %cst_6 : f32 to vector<8x64xf32>
    %9 = arith.mulf %5, %8 : vector<8x64xf32>
    %10 = math.erf %9 : vector<8x64xf32>
    %cst_7 = arith.constant 1.000000e+00 : f32
    %11 = vector.broadcast %cst_7 : f32 to vector<8x64xf32>
    %12 = arith.addf %11, %10 : vector<8x64xf32>
    %13 = arith.mulf %7, %12 : vector<8x64xf32>
    %c0_8 = arith.constant 0 : index
    %c0_9 = arith.constant 0 : index
    %14 = vector.load %arg4[%c0_8, %c0_9] : memref<64x32xf32, #tpu.memory_space<vmem>>, vector<64x32xf32>
    %cst_10 = arith.constant dense<0.000000e+00> : vector<8x32xf32>
    %15 = tpu.matmul %13, %14, %cst_10 {dimension_numbers = #tpu.dot_dimension_numbers<[1], [0], [0], [1], [0, 0, 1, 1], [], []>} : vector<8x64xf32>, vector<64x32xf32>, vector<8x32xf32> -> vector<8x32xf32>
    %c0_11 = arith.constant 0 : index
    %c0_12 = arith.constant 0 : index
    %16 = vector.load %arg5[%c0_11, %c0_12] : memref<1x32xf32, #tpu.memory_space<vmem>>, vector<1x32xf32>
    %17 = vector.broadcast %16 : vector<1x32xf32> to vector<8x32xf32>
    %18 = arith.addf %15, %17 : vector<8x32xf32>
    %19 = arith.addf %0, %18 : vector<8x32xf32>
    %cst_13 = arith.constant dense<0.000000e+00> : vector<8xf32>
    %20 = vector.multi_reduction <add>, %19, %cst_13 [1] : vector<8x32xf32> to vector<8xf32>
    %21 = vector.shape_cast %20 : vector<8xf32> to vector<8x1xf32>
    %cst_14 = arith.constant 3.125000e-02 : f32
    %22 = vector.broadcast %cst_14 : f32 to vector<8x1xf32>
    %23 = arith.mulf %21, %22 : vector<8x1xf32>
    %24 = arith.mulf %19, %19 : vector<8x32xf32>
    %cst_15 = arith.constant dense<0.000000e+00> : vector<8xf32>
    %25 = vector.multi_reduction <add>, %24, %cst_15 [1] : vector<8x32xf32> to vector<8xf32>
    %26 = vector.shape_cast %25 : vector<8xf32> to vector<8x1xf32>
    %cst_16 = arith.constant 3.125000e-02 : f32
    %27 = vector.broadcast %cst_16 : f32 to vector<8x1xf32>
    %28 = arith.mulf %26, %27 : vector<8x1xf32>
    %29 = arith.mulf %23, %23 : vector<8x1xf32>
    %30 = arith.subf %28, %29 : vector<8x1xf32>
    %31 = vector.broadcast %23 : vector<8x1xf32> to vector<8x32xf32>
    %32 = arith.subf %19, %31 : vector<8x32xf32>
    %cst_17 = arith.constant 9.99999974E-6 : f32
    %33 = vector.broadcast %cst_17 : f32 to vector<8x1xf32>
    %34 = arith.addf %30, %33 : vector<8x1xf32>
    %35 = math.rsqrt %34 : vector<8x1xf32>
    %36 = vector.broadcast %35 : vector<8x1xf32> to vector<8x32xf32>
    %37 = arith.mulf %32, %36 : vector<8x32xf32>
    %c0_18 = arith.constant 0 : index
    %c0_19 = arith.constant 0 : index
    %38 = vector.load %arg6[%c0_18, %c0_19] : memref<1x32xf32, #tpu.memory_space<vmem>>, vector<1x32xf32>
    %39 = vector.broadcast %38 : vector<1x32xf32> to vector<8x32xf32>
    %40 = arith.mulf %37, %39 : vector<8x32xf32>
    %c0_20 = arith.constant 0 : index
    %c0_21 = arith.constant 0 : index
    %41 = vector.load %arg7[%c0_20, %c0_21] : memref<1x32xf32, #tpu.memory_space<vmem>>, vector<1x32xf32>
    %42 = vector.broadcast %41 : vector<1x32xf32> to vector<8x32xf32>
    %43 = arith.addf %40, %42 : vector<8x32xf32>
    %c0_22 = arith.constant 0 : index
    %c0_23 = arith.constant 0 : index
    %44 = vector.load %arg8[%c0_22, %c0_23] : memref<8x32xf32, #tpu.memory_space<vmem>>, vector<8x32xf32>
    tpu.vector_store %arg8[%c0_22, %c0_23], %43 {strides = array<i32>} : memref<8x32xf32, #tpu.memory_space<vmem>>, vector<8x32xf32>,
    return
  }
  func.func @transform_0(%arg0: i32) -> (i32, i32) {
    %c0_i32 = arith.constant 0 : i32
    %c0_i32_0 = arith.constant 0 : i32
    return %arg0, %c0_i32 : i32, i32
  }
  func.func @transform_1(%arg0: i32) -> (i32, i32) {
    %c0_i32 = arith.constant 0 : i32
    %c0_i32_0 = arith.constant 0 : i32
    %c0_i32_1 = arith.constant 0 : i32
    return %c0_i32, %c0_i32_0 : i32, i32
  }
  func.func @transform_2(%arg0: i32) -> (i32, i32) {
    %c0_i32 = arith.constant 0 : i32
    %c0_i32_0 = arith.constant 0 : i32
    %c0_i32_1 = arith.constant 0 : i32
    return %c0_i32, %c0_i32_0 : i32, i32
  }
  func.func @transform_3(%arg0: i32) -> (i32, i32) {
    %c0_i32 = arith.constant 0 : i32
    %c0_i32_0 = arith.constant 0 : i32
    %c0_i32_1 = arith.constant 0 : i32
    return %c0_i32, %c0_i32_0 : i32, i32
  }
  func.func @transform_4(%arg0: i32) -> (i32, i32) {
    %c0_i32 = arith.constant 0 : i32
    %c0_i32_0 = arith.constant 0 : i32
    %c0_i32_1 = arith.constant 0 : i32
    return %c0_i32, %c0_i32_0 : i32, i32
  }
  func.func @transform_5(%arg0: i32) -> (i32, i32) {
    %c0_i32 = arith.constant 0 : i32
    %c0_i32_0 = arith.constant 0 : i32
    %c0_i32_1 = arith.constant 0 : i32
    return %c0_i32, %c0_i32_0 : i32, i32
  }
  func.func @transform_6(%arg0: i32) -> (i32, i32) {
    %c0_i32 = arith.constant 0 : i32
    %c0_i32_0 = arith.constant 0 : i32
    %c0_i32_1 = arith.constant 0 : i32
    return %c0_i32, %c0_i32_0 : i32, i32
  }
  func.func @transform_7(%arg0: i32) -> (i32, i32) {
    %c0_i32 = arith.constant 0 : i32
    %c0_i32_0 = arith.constant 0 : i32
    return %arg0, %c0_i32 : i32, i32
  }
}

module attributes {stable_mosaic.version = 11 : i64} {
  func.func @_adapter_kernel(%arg0: i32, %arg1: memref<8x32xf32, #tpu.memory_space<vmem>>, %arg2: memref<32x64xf32, #tpu.memory_space<vmem>>, %arg3: memref<1x64xf32, #tpu.memory_space<vmem>>, %arg4: memref<64x32xf32, #tpu.memory_space<vmem>>, %arg5: memref<1x32xf32, #tpu.memory_space<vmem>>, %arg6: memref<1x32xf32, #tpu.memory_space<vmem>>, %arg7: memref<1x32xf32, #tpu.memory_space<vmem>>, %arg8: memref<8x32xf32, #tpu.memory_space<vmem>>) attributes {dimension_semantics = [#tpu.dimension_semantics<parallel>], iteration_bounds = array<i64: 2>, scalar_prefetch = 0 : i64, scratch_operands = 0 : i64, tpu.core_type = #tpu.core_type<tc>, window_params = [{transform_indices = @transform_0, window_bounds = array<i64: 8, 32>}, {pipeline_mode = #tpu.pipeline_mode<synchronous>, transform_indices = @transform_1, window_bounds = array<i64: 32, 64>}, {pipeline_mode = #tpu.pipeline_mode<synchronous>, transform_indices = @transform_2, window_bounds = array<i64: 1, 64>}, {pipeline_mode = #tpu.pipeline_mode<synchronous>, transform_indices = @transform_3, window_bounds = array<i64: 64, 32>}, {pipeline_mode = #tpu.pipeline_mode<synchronous>, transform_indices = @transform_4, window_bounds = array<i64: 1, 32>}, {pipeline_mode = #tpu.pipeline_mode<synchronous>, transform_indices = @transform_5, window_bounds = array<i64: 1, 32>}, {pipeline_mode = #tpu.pipeline_mode<synchronous>, transform_indices = @transform_6, window_bounds = array<i64: 1, 32>}, {transform_indices = @transform_7, window_bounds = array<i64: 8, 32>}]} {
    %c0 = arith.constant 0 : index
    %c0_0 = arith.constant 0 : index
    %0 = vector.load %arg1[%c0, %c0_0] : memref<8x32xf32, #tpu.memory_space<vmem>>, vector<8x32xf32>
    %c0_1 = arith.constant 0 : index
    %c0_2 = arith.constant 0 : index
    %1 = vector.load %arg2[%c0_1, %c0_2] : memref<32x64xf32, #tpu.memory_space<vmem>>, vector<32x64xf32>
    %cst = arith.constant dense<0.000000e+00> : vector<8x64xf32>
    %2 = tpu.matmul %0, %1, %cst {dimension_numbers = #tpu.dot_dimension_numbers<[1], [0], [0], [1], [0, 0, 1, 1], [], []>} : vector<8x32xf32>, vector<32x64xf32>, vector<8x64xf32> -> vector<8x64xf32>
    %c0_3 = arith.constant 0 : index
    %c0_4 = arith.constant 0 : index
    %3 = vector.load %arg3[%c0_3, %c0_4] : memref<1x64xf32, #tpu.memory_space<vmem>>, vector<1x64xf32>
    %4 = vector.broadcast %3 : vector<1x64xf32> to vector<8x64xf32>
    %5 = arith.addf %2, %4 : vector<8x64xf32>
    %cst_5 = arith.constant 5.000000e-01 : f32
    %6 = vector.broadcast %cst_5 : f32 to vector<8x64xf32>
    %7 = arith.mulf %6, %5 : vector<8x64xf32>
    %cst_6 = arith.constant 0.707106769 : f32
    %8 = vector.broadcast %cst_6 : f32 to vector<8x64xf32>
    %9 = arith.mulf %5, %8 : vector<8x64xf32>
    %10 = math.erf %9 : vector<8x64xf32>
    %cst_7 = arith.constant 1.000000e+00 : f32
    %11 = vector.broadcast %cst_7 : f32 to vector<8x64xf32>
    %12 = arith.addf %11, %10 : vector<8x64xf32>
    %13 = arith.mulf %7, %12 : vector<8x64xf32>
    %c0_8 = arith.constant 0 : index
    %c0_9 = arith.constant 0 : index
    %14 = vector.load %arg4[%c0_8, %c0_9] : memref<64x32xf32, #tpu.memory_space<vmem>>, vector<64x32xf32>
    %cst_10 = arith.constant dense<0.000000e+00> : vector<8x32xf32>
    %15 = tpu.matmul %13, %14, %cst_10 {dimension_numbers = #tpu.dot_dimension_numbers<[1], [0], [0], [1], [0, 0, 1, 1], [], []>} : vector<8x64xf32>, vector<64x32xf32>, vector<8x32xf32> -> vector<8x32xf32>
    %c0_11 = arith.constant 0 : index
    %c0_12 = arith.constant 0 : index
    %16 = vector.load %arg5[%c0_11, %c0_12] : memref<1x32xf32, #tpu.memory_space<vmem>>, vector<1x32xf32>
    %17 = vector.broadcast %16 : vector<1x32xf32> to vector<8x32xf32>
    %18 = arith.addf %15, %17 : vector<8x32xf32>
    %19 = arith.addf %0, %18 : vector<8x32xf32>
    %cst_13 = arith.constant dense<0.000000e+00> : vector<8xf32>
    %20 = vector.multi_reduction <add>, %19, %cst_13 [1] : vector<8x32xf32> to vector<8xf32>
    %21 = vector.shape_cast %20 : vector<8xf32> to vector<8x1xf32>
    %cst_14 = arith.constant 3.125000e-02 : f32
    %22 = vector.broadcast %cst_14 : f32 to vector<8x1xf32>
    %23 = arith.mulf %21, %22 : vector<8x1xf32>
    %24 = arith.mulf %19, %19 : vector<8x32xf32>
    %cst_15 = arith.constant dense<0.000000e+00> : vector<8xf32>
    %25 = vector.multi_reduction <add>, %24, %cst_15 [1] : vector<8x32xf32> to vector<8xf32>
    %26 = vector.shape_cast %25 : vector<8xf32> to vector<8x1xf32>
    %cst_16 = arith.constant 3.125000e-02 : f32
    %27 = vector.broadcast %cst_16 : f32 to vector<8x1xf32>
    %28 = arith.mulf %26, %27 : vector<8x1xf32>
    %29 = arith.mulf %23, %23 : vector<8x1xf32>
    %30 = arith.subf %28, %29 : vector<8x1xf32>
    %31 = vector.broadcast %23 : vector<8x1xf32> to vector<8x32xf32>
    %32 = arith.subf %19, %31 : vector<8x32xf32>
    %cst_17 = arith.constant 9.99999974E-6 : f32
    %33 = vector.broadcast %cst_17 : f32 to vector<8x1xf32>
    %34 = arith.addf %30, %33 : vector<8x1xf32>
    %35 = math.rsqrt %34 : vector<8x1xf32>
    %36 = vector.broadcast %35 : vector<8x1xf32> to vector<8x32xf32>
    %37 = arith.mulf %32, %36 : vector<8x32xf32>
    %c0_18 = arith.constant 0 : index
    %c0_19 = arith.constant 0 : index
    %38 = vector.load %arg6[%c0_18, %c0_19] : memref<1x32xf32, #tpu.memory_space<vmem>>, vector<1x32xf32>
    %39 = vector.broadcast %38 : vector<1x32xf32> to vector<8x32xf32>
    %40 = arith.mulf %37, %39 : vector<8x32xf32>
    %c0_20 = arith.constant 0 : index
    %c0_21 = arith.constant 0 : index
    %41 = vector.load %arg7[%c0_20, %c0_21] : memref<1x32xf32, #tpu.memory_space<vmem>>, vector<1x32xf32>
    %42 = vector.broadcast %41 : vector<1x32xf32> to vector<8x32xf32>
    %43 = arith.addf %40, %42 : vector<8x32xf32>
    %c0_22 = arith.constant 0 : index
    %c0_23 = arith.constant 0 : index
    %44 = vector.load %arg8[%c0_22, %c0_23] : memref<8x32xf32, #tpu.memory_space<vmem>>, vector<8x32xf32>
    tpu.vector_store %arg8[%c0_22, %c0_23], %43 {strides = array<i32>} : memref<8x32xf32, #tpu.memory_space<vmem>>, vector<8x32xf32>,
    return
  }
  func.func @transform_0(%arg0: i32) -> (i32, i32) {
    %c0_i32 = arith.constant 0 : i32
    %c0_i32_0 = arith.constant 0 : i32
    return %arg0, %c0_i32 : i32, i32
  }
  func.func @transform_1(%arg0: i32) -> (i32, i32) {
    %c0_i32 = arith.constant 0 : i32
    %c0_i32_0 = arith.constant 0 : i32
    %c0_i32_1 = arith.constant 0 : i32
    return %c0_i32, %c0_i32_0 : i32, i32
  }
  func.func @transform_2(%arg0: i32) -> (i32, i32) {
    %c0_i32 = arith.constant 0 : i32
    %c0_i32_0 = arith.constant 0 : i32
    %c0_i32_1 = arith.constant 0 : i32
    return %c0_i32, %c0_i32_0 : i32, i32
  }
  func.func @transform_3(%arg0: i32) -> (i32, i32) {
    %c0_i32 = arith.constant 0 : i32
    %c0_i32_0 = arith.constant 0 : i32
    %c0_i32_1 = arith.constant 0 : i32
    return %c0_i32, %c0_i32_0 : i32, i32
  }
  func.func @transform_4(%arg0: i32) -> (i32, i32) {
    %c0_i32 = arith.constant 0 : i32
    %c0_i32_0 = arith.constant 0 : i32
    %c0_i32_1 = arith.constant 0 : i32
    return %c0_i32, %c0_i32_0 : i32, i32
  }
  func.func @transform_5(%arg0: i32) -> (i32, i32) {
    %c0_i32 = arith.constant 0 : i32
    %c0_i32_0 = arith.constant 0 : i32
    %c0_i32_1 = arith.constant 0 : i32
    return %c0_i32, %c0_i32_0 : i32, i32
  }
  func.func @transform_6(%arg0: i32) -> (i32, i32) {
    %c0_i32 = arith.constant 0 : i32
    %c0_i32_0 = arith.constant 0 : i32
    %c0_i32_1 = arith.constant 0 : i32
    return %c0_i32, %c0_i32_0 : i32, i32
  }
  func.func @transform_7(%arg0: i32) -> (i32, i32) {
    %c0_i32 = arith.constant 0 : i32
    %c0_i32_0 = arith.constant 0 : i32
    return %arg0, %c0_i32 : i32, i32
  }
}

</mosaic_0001>

<llo_original>
// kernel: tpu_custom_call.1
$region0: #{tpu_custom_call.1}
  #allocation0 [shape = 'u32[]', space=smem, size = 0x4, offset = 0x4, fixed_abs, tag = 'smem constant byte address 0x4 - core index']
  #allocation1 [shape = 'u32[144,128]{1,0:T(1,128)}', space=vmem, size = 0x12000, scoped, tag = 'internal scratch']
  %s0 = inlined_call_operand.vmem [shape: f32[16,32], index: 0, kind: input, shape index: {}]
  %s1 = inlined_call_operand.vmem [shape: f32[32,64], index: 1, kind: input, shape index: {}]
  %s2 = inlined_call_operand.vmem [shape: f32[1,64], index: 2, kind: input, shape index: {}]
  %s3 = inlined_call_operand.vmem [shape: f32[64,32], index: 3, kind: input, shape index: {}]
  %s4 = inlined_call_operand.vmem [shape: f32[1,32], index: 4, kind: input, shape index: {}]
  %s5 = inlined_call_operand.vmem [shape: f32[1,32], index: 5, kind: input, shape index: {}]
  %s6 = inlined_call_operand.vmem [shape: f32[1,32], index: 6, kind: input, shape index: {}]
  %s7 = inlined_call_operand.hbm [shape: f32[16,32], index: 7, kind: output, shape index: {}]
  %s8 = sld [smem:[#allocation0]]
  $region61: #{tpu_custom_call.1} parent=0
    _
  %s10 = ssub.s32 1, %s8
  %s11 = scalar_select 0, %s10, %s8
  $region1: #{tpu_custom_call.1} parent=0
    #allocation2 [shape = 'u8[8192]{0}', space=vmem, size = 0x2000, scoped, tag = 'output window, operand 0']
    #allocation3 [shape = 's32[2]{0}', space=sflag, size = 0x8, scoped, tag = 'scoped memory for tpu_custom_call.1']
    %12 = vsyncpa [#allocation3], 0
    %s13 = scalar_lea.sflag [#allocation3], 1
    %14 = vsyncpa %s13, 0
    loop: start=0, step=1, limit=4
    $region2: #{tpu_custom_call.1} parent=1 // loop_pre_header
      _
    $region3: #{tpu_custom_call.1} parent=1 // loop_header
      %s16 = sphi 0, %s20
      %p17 = scmp.ge.s32.totalorder %s16, 4
      %s26 = sphi 0, %s28
      %s29 = sphi 0, %s26
      %s30 = sphi 0, %s29
      %s46 = sphi 0, %s30
      %s50 = sphi 0, %s50
      %s52 = sphi 0, %s50
      %s53 = sphi 0, %s52
      %s67 = sphi 0, %s53
      %s71 = sphi 0, %s71
      %s73 = sphi 0, %s71
      %s74 = sphi 0, %s73
      %s88 = sphi 0, %s74
      %s92 = sphi 0, %s92
      %s94 = sphi 0, %s92
      %s95 = sphi 0, %s94
      %s109 = sphi 0, %s95
      %s113 = sphi 0, %s113
      %s115 = sphi 0, %s113
      %s116 = sphi 0, %s115
      %s130 = sphi 0, %s116
      %s134 = sphi 0, %s134
      %s136 = sphi 0, %s134
      %s137 = sphi 0, %s136
      %s151 = sphi 0, %s137
      %s155 = sphi 0, %s155
      %s157 = sphi 0, %s155
      %s158 = sphi 0, %s157
      %s172 = sphi 0, %s158
      %s178 = sphi 0, %s180
      %s181 = sphi 0, %s178
      %s182 = sphi 0, %s181
      %s198 = sphi 0, %s182
    $region4: #{tpu_custom_call.1} parent=1 // loop_header_branch
      %19 = sbr.rel (%p17) target = $region8
    $region5: #{tpu_custom_call.1} parent=1 // loop_body
      %s21 = ssub.s32 %s16, 1
      %s22 = ssub.s32 %s16, 2
      %s23 = sadd.s32 %s16, 1
      %s24 = ssub.s32 %s16, %s23
      %p25 = scmp.eq.s32.totalorder %s24, 0
      %s27 = sadd.s32 %s26, 1
      %s28 = scalar_select %p25, %s26, %s27
      %p31 = pneg %p25
      %p32 = scmp.eq.s32.totalorder %s16, 1
      %p33 = por %p31, %p32
      %p34 = scmp.ne.s32.totalorder %s26, %s29
      %p35 = scmp.eq.s32.totalorder %s16, 0
      %p36 = por %p34, %p35
      %p37 = scmp.ne.s32.totalorder %s26, %s29
      %p38 = scmp.eq.s32.totalorder %s21, 1
      %p39 = por %p37, %p38
      %p40 = scmp.ne.s32.totalorder %s29, %s30
      %p41 = scmp.eq.s32.totalorder %s21, 0
      %p42 = por %p40, %p41
      %p43 = scmp.ne.s32.totalorder %s29, %s30
      %p44 = scmp.eq.s32.totalorder %s22, 1
      %p45 = por %p43, %p44
      %p47 = scmp.ne.s32.totalorder %s30, %s46
      %p48 = scmp.eq.s32.totalorder %s22, 0
      %p49 = por %p47, %p48
      %s51 = sadd.s32 %s50, 1
      %p54 = scmp.eq.s32.totalorder %s16, 1
      %p55 = scmp.ne.s32.totalorder %s50, %s52
      %p56 = scmp.eq.s32.totalorder %s16, 0
      %p57 = por %p55, %p56
      %p58 = scmp.ne.s32.totalorder %s50, %s52
      %p59 = scmp.eq.s32.totalorder %s21, 1
      %p60 = por %p58, %p59
      %p61 = scmp.ne.s32.totalorder %s52, %s53
      %p62 = scmp.eq.s32.totalorder %s21, 0
      %p63 = por %p61, %p62
      %p64 = scmp.ne.s32.totalorder %s52, %s53
      %p65 = scmp.eq.s32.totalorder %s22, 1
      %p66 = por %p64, %p65
      %p68 = scmp.ne.s32.totalorder %s53, %s67
      %p69 = scmp.eq.s32.totalorder %s22, 0
      %p70 = por %p68, %p69
      %s72 = sadd.s32 %s71, 1
      %p75 = scmp.eq.s32.totalorder %s16, 1
      %p76 = scmp.ne.s32.totalorder %s71, %s73
      %p77 = scmp.eq.s32.totalorder %s16, 0
      %p78 = por %p76, %p77
      %p79 = scmp.ne.s32.totalorder %s71, %s73
      %p80 = scmp.eq.s32.totalorder %s21, 1
      %p81 = por %p79, %p80
      %p82 = scmp.ne.s32.totalorder %s73, %s74
      %p83 = scmp.eq.s32.totalorder %s21, 0
      %p84 = por %p82, %p83
      %p85 = scmp.ne.s32.totalorder %s73, %s74
      %p86 = scmp.eq.s32.totalorder %s22, 1
      %p87 = por %p85, %p86
      %p89 = scmp.ne.s32.totalorder %s74, %s88
      %p90 = scmp.eq.s32.totalorder %s22, 0
      %p91 = por %p89, %p90
      %s93 = sadd.s32 %s92, 1
      %p96 = scmp.eq.s32.totalorder %s16, 1
      %p97 = scmp.ne.s32.totalorder %s92, %s94
      %p98 = scmp.eq.s32.totalorder %s16, 0
      %p99 = por %p97, %p98
      %p100 = scmp.ne.s32.totalorder %s92, %s94
      %p101 = scmp.eq.s32.totalorder %s21, 1
      %p102 = por %p100, %p101
      %p103 = scmp.ne.s32.totalorder %s94, %s95
      %p104 = scmp.eq.s32.totalorder %s21, 0
      %p105 = por %p103, %p104
      %p106 = scmp.ne.s32.totalorder %s94, %s95
      %p107 = scmp.eq.s32.totalorder %s22, 1
      %p108 = por %p106, %p107
      %p110 = scmp.ne.s32.totalorder %s95, %s109
      %p111 = scmp.eq.s32.totalorder %s22, 0
      %p112 = por %p110, %p111
      %s114 = sadd.s32 %s113, 1
      %p117 = scmp.eq.s32.totalorder %s16, 1
      %p118 = scmp.ne.s32.totalorder %s113, %s115
      %p119 = scmp.eq.s32.totalorder %s16, 0
      %p120 = por %p118, %p119
      %p121 = scmp.ne.s32.totalorder %s113, %s115
      %p122 = scmp.eq.s32.totalorder %s21, 1
      %p123 = por %p121, %p122
      %p124 = scmp.ne.s32.totalorder %s115, %s116
      %p125 = scmp.eq.s32.totalorder %s21, 0
      %p126 = por %p124, %p125
      %p127 = scmp.ne.s32.totalorder %s115, %s116
      %p128 = scmp.eq.s32.totalorder %s22, 1
      %p129 = por %p127, %p128
      %p131 = scmp.ne.s32.totalorder %s116, %s130
      %p132 = scmp.eq.s32.totalorder %s22, 0
      %p133 = por %p131, %p132
      %s135 = sadd.s32 %s134, 1
      %p138 = scmp.eq.s32.totalorder %s16, 1
      %p139 = scmp.ne.s32.totalorder %s134, %s136
      %p140 = scmp.eq.s32.totalorder %s16, 0
      %p141 = por %p139, %p140
      %p142 = scmp.ne.s32.totalorder %s134, %s136
      %p143 = scmp.eq.s32.totalorder %s21, 1
      %p144 = por %p142, %p143
      %p145 = scmp.ne.s32.totalorder %s136, %s137
      %p146 = scmp.eq.s32.totalorder %s21, 0
      %p147 = por %p145, %p146
      %p148 = scmp.ne.s32.totalorder %s136, %s137
      %p149 = scmp.eq.s32.totalorder %s22, 1
      %p150 = por %p148, %p149
      %p152 = scmp.ne.s32.totalorder %s137, %s151
      %p153 = scmp.eq.s32.totalorder %s22, 0
      %p154 = por %p152, %p153
      %s156 = sadd.s32 %s155, 1
      %p159 = scmp.eq.s32.totalorder %s16, 1
      %p160 = scmp.ne.s32.totalorder %s155, %s157
      %p161 = scmp.eq.s32.totalorder %s16, 0
      %p162 = por %p160, %p161
      %p163 = scmp.ne.s32.totalorder %s155, %s157
      %p164 = scmp.eq.s32.totalorder %s21, 1
      %p165 = por %p163, %p164
      %p166 = scmp.ne.s32.totalorder %s157, %s158
      %p167 = scmp.eq.s32.totalorder %s21, 0
      %p168 = por %p166, %p167
      %p169 = scmp.ne.s32.totalorder %s157, %s158
      %p170 = scmp.eq.s32.totalorder %s22, 1
      %p171 = por %p169, %p170
      %p173 = scmp.ne.s32.totalorder %s158, %s172
      %p174 = scmp.eq.s32.totalorder %s22, 0
      %p175 = por %p173, %p174
      %s176 = ssub.s32 %s16, %s23
      %p177 = scmp.eq.s32.totalorder %s176, 0
      %s179 = sadd.s32 %s178, 1
      %s180 = scalar_select %p177, %s178, %s179
      %p183 = pneg %p177
      %p184 = scmp.eq.s32.totalorder %s16, 1
      %p185 = por %p183, %p184
      %p186 = scmp.ne.s32.totalorder %s178, %s181
      %p187 = scmp.eq.s32.totalorder %s16, 0
      %p188 = por %p186, %p187
      %p189 = scmp.ne.s32.totalorder %s178, %s181
      %p190 = scmp.eq.s32.totalorder %s21, 1
      %p191 = por %p189, %p190
      %p192 = scmp.ne.s32.totalorder %s181, %s182
      %p193 = scmp.eq.s32.totalorder %s21, 0
      %p194 = por %p192, %p193
      %p195 = scmp.ne.s32.totalorder %s181, %s182
      %p196 = scmp.eq.s32.totalorder %s22, 1
      %p197 = por %p195, %p196
      %p199 = scmp.ne.s32.totalorder %s182, %s198
      %p200 = scmp.eq.s32.totalorder %s22, 0
      %p201 = por %p199, %p200
      %p202 = scmp.le.s32.totalorder 1, %s16
      %p203 = scmp.lt.s32.totalorder %s16, 3
      %p204 = pnand %p202, %p203
      %p205 = pneg %p204
      // Predicated region
      $region9: #{tpu_custom_call.1} parent=5 // pred_check
        _
      $region10: #{tpu_custom_call.1} parent=5 // pred_check_branch
        %207 = sbr.rel (%p204) target = $region12
      $region11: #{tpu_custom_call.1} parent=5 // pred_region
        %s208 = ssub.s32 %s16, 1
        // Predicated region
        $region13: #{tpu_custom_call.1} parent=11 // pred_check
          %p209 = pneg %p63
        $region14: #{tpu_custom_call.1} parent=11 // pred_check_branch
          %211 = sbr.rel (%p209) target = $region16
        $region15: #{tpu_custom_call.1} parent=11 // pred_region
          _
        $region16: #{tpu_custom_call.1} parent=11 // pred_fallthru
          _
        // Predicated region
        $region17: #{tpu_custom_call.1} parent=11 // pred_check
          %p212 = pneg %p84
        $region18: #{tpu_custom_call.1} parent=11 // pred_check_branch
          %214 = sbr.rel (%p212) target = $region20
        $region19: #{tpu_custom_call.1} parent=11 // pred_region
          _
        $region20: #{tpu_custom_call.1} parent=11 // pred_fallthru
          _
        // Predicated region
        $region21: #{tpu_custom_call.1} parent=11 // pred_check
          %p215 = pneg %p105
        $region22: #{tpu_custom_call.1} parent=11 // pred_check_branch
          %217 = sbr.rel (%p215) target = $region24
        $region23: #{tpu_custom_call.1} parent=11 // pred_region
          _
        $region24: #{tpu_custom_call.1} parent=11 // pred_fallthru
          _
        // Predicated region
        $region25: #{tpu_custom_call.1} parent=11 // pred_check
          %p218 = pneg %p126
        $region26: #{tpu_custom_call.1} parent=11 // pred_check_branch
          %220 = sbr.rel (%p218) target = $region28
        $region27: #{tpu_custom_call.1} parent=11 // pred_region
          _
        $region28: #{tpu_custom_call.1} parent=11 // pred_fallthru
          _
        // Predicated region
        $region29: #{tpu_custom_call.1} parent=11 // pred_check
          %p221 = pneg %p147
        $region30: #{tpu_custom_call.1} parent=11 // pred_check_branch
          %223 = sbr.rel (%p221) target = $region32
        $region31: #{tpu_custom_call.1} parent=11 // pred_region
          _
        $region32: #{tpu_custom_call.1} parent=11 // pred_fallthru
          _
        // Predicated region
        $region33: #{tpu_custom_call.1} parent=11 // pred_check
          %p224 = pneg %p168
        $region34: #{tpu_custom_call.1} parent=11 // pred_check_branch
          %226 = sbr.rel (%p224) target = $region36
        $region35: #{tpu_custom_call.1} parent=11 // pred_region
          _
        $region36: #{tpu_custom_call.1} parent=11 // pred_fallthru
          _
      $region12: #{tpu_custom_call.1} parent=5 // pred_fallthru
        _
      %p227 = scmp.lt.s32.totalorder %s16, 2
      // Predicated region
      $region37: #{tpu_custom_call.1} parent=5 // pred_check
        %p228 = pneg %p227
      $region38: #{tpu_custom_call.1} parent=5 // pred_check_branch
        %230 = sbr.rel (%p228) target = $region40
      $region39: #{tpu_custom_call.1} parent=5 // pred_region
        // Predicated region
        $region41: #{tpu_custom_call.1} parent=39 // pred_check
          %p231 = pneg %p36
        $region42: #{tpu_custom_call.1} parent=39 // pred_check_branch
          %233 = sbr.rel (%p231) target = $region44
        $region43: #{tpu_custom_call.1} parent=39 // pred_region
          %p234 = scmp.lt.s32.totalorder %s16, 1
          %s235 = scalar_select %p234, %s16, 1
          %s236 = smul.addr %s235, 8
          %s237 = scalar_lea.vmem %s0, %s236
        $region44: #{tpu_custom_call.1} parent=39 // pred_fallthru
          _
      $region40: #{tpu_custom_call.1} parent=5 // pred_fallthru
        _
      %p238 = scmp.le.s32.totalorder 1, %s16
      %p239 = scmp.lt.s32.totalorder %s16, 3
      %p240 = pnand %p238, %p239
      %p241 = pneg %p240
      // Predicated region
      $region45: #{tpu_custom_call.1} parent=5 // pred_check
        _
      $region46: #{tpu_custom_call.1} parent=5 // pred_check_branch
        %243 = sbr.rel (%p240) target = $region48
      $region47: #{tpu_custom_call.1} parent=5 // pred_region
        %s244 = ssub.s32 %s16, 1
        %p245 = scmp.lt.s32.totalorder %s21, 1
        %s246 = scalar_select %p245, %s21, 1
        %s247 = smul.addr %s246, 8
        %s248 = scalar_lea.vmem %s0, %s247
        %p249 = pneg %p42
        %p250 = pneg %p39
        %p251 = pneg %p63
        %p252 = pneg %p60
        %p253 = pneg %p84
        %p254 = pneg %p81
        %p255 = pneg %p105
        %p256 = pneg %p102
        %p257 = pneg %p126
        %p258 = pneg %p123
        %p259 = pneg %p147
        %p260 = pneg %p144
        %p261 = pneg %p168
        %p262 = pneg %p165
        %p263 = pneg %p194
        %p264 = pneg %p191
        %s265 = sand.u32 %s181, 1
        %s266 = scalar_lea.sflag [#allocation3], %s265
        %s267 = sand.u32 %s181, 1
        %s268 = smul.addr %s267, 8
        %s269 = scalar_lea.vmem [#allocation2], %s268
        %p270 = scmp.lt.s32.totalorder %s21, 1
        %s271 = scalar_select %p270, %s21, 1
        %s272 = smul.addr %s271, 8
        %s273 = scalar_lea.vmem %s0, %s272
        %v274 = vld [vmem:[%s273] sm:$0xff]
        %v275 = vld [vmem:[%s1] sm:$0xff]
        %v276 = vld [vmem:[%s1 + $0x8] sm:$0xff]
        %v277 = vld [vmem:[%s1 + $0x10] sm:$0xff]
        %v278 = vld [vmem:[%s1 + $0x18] sm:$0xff]
        %v279 = vld [vmem:[%s2] sm:$0x1]
        %v281 = vlaneseq
        %v282 = vshrl.u32 %v281, 7
        %v283 = vsub.s32 0, %v282
        %v284 = vrot.slane %v279, %v283
        %vm286 = vcmask 261120
        %v288 = vsel %vm286, %v274, 0
        %290 = vmatprep.subr.mxu0 0.0
        %291 = vmatpush1.msra.mxu0 %v275
        %292 = vmatprep.subr.mxu0 0.0
        %293 = vmatpush1.msra.mxu0 %v276
        %294 = vmatprep.subr.mxu0 0.0
        %295 = vmatpush1.msra.mxu0 %v277
        %296 = vmatprep.subr.mxu0 0.0
        %297 = vmatpush1.msra.mxu0 %v278
        %298 = vmatprep.subr.mxu0 0.0
        %299 = vmatpush1.msra.mxu0 0.0
        %300 = vmatprep.subr.mxu0 0.0
        %301 = vmatpush1.msra.mxu0 0.0
        %302 = vmatprep.subr.mxu0 0.0
        %303 = vmatpush1.msra.mxu0 0.0
        %304 = vmatprep.subr.mxu0 0.0
        %305 = vmatpush1.msra.mxu0 0.0
        %306 = vmatprep.subr.mxu0 0.0
        %307 = vmatpush1.msra.mxu0 0.0
        %308 = vmatprep.subr.mxu0 0.0
        %309 = vmatpush1.msra.mxu0 0.0
        %310 = vmatprep.subr.mxu0 0.0
        %311 = vmatpush1.msra.mxu0 0.0
        %312 = vmatprep.subr.mxu0 0.0
        %313 = vmatpush1.msra.mxu0 0.0
        %314 = vmatprep.subr.mxu0 0.0
        %315 = vmatpush1.msra.mxu0 0.0
        %316 = vmatprep.subr.mxu0 0.0
        %317 = vmatpush1.msra.mxu0 0.0
        %318 = vmatprep.subr.mxu0 0.0
        %319 = vmatpush1.msra.mxu0 0.0
        %320 = vmatprep.subr.mxu0 0.0
        %321 = vmatpush1.msra.mxu0 0.0
        %322 = vmatprep.subr.mxu0 0.0
        %323 = vmatpush1.msra.mxu0 0.0
        %324 = vmatprep.subr.mxu0 0.0
        %325 = vmatpush1.msra.mxu0 0.0
        %326 = vmatprep.subr.mxu0 0.0
        %327 = vmatpush1.msra.mxu0 0.0
        %328 = vmatprep.subr.mxu0 0.0
        %329 = vmatpush1.msra.mxu0 0.0
        %330 = vmatprep.subr.mxu0 0.0
        %331 = vmatpush1.msra.mxu0 0.0
        %332 = vmatprep.subr.mxu0 0.0
        %333 = vmatpush1.msra.mxu0 0.0
        %334 = vmatprep.subr.mxu0 0.0
        %335 = vmatpush1.msra.mxu0 0.0
        %336 = vmatprep.subr.mxu0 0.0
        %337 = vmatpush1.msra.mxu0 0.0
        %338 = vmatprep.subr.mxu0 0.0
        %339 = vmatpush1.msra.mxu0 0.0
        %340 = vmatprep.subr.mxu0 0.0
        %341 = vmatpush1.msra.mxu0 0.0
        %342 = vmatprep.subr.mxu0 0.0
        %343 = vmatpush1.msra.mxu0 0.0
        %344 = vmatprep.subr.mxu0 0.0
        %345 = vmatpush1.msra.mxu0 0.0
        %346 = vmatprep.subr.mxu0 0.0
        %347 = vmatpush1.msra.mxu0 0.0
        %348 = vmatprep.subr.mxu0 0.0
        %349 = vmatpush1.msra.mxu0 0.0
        %350 = vmatprep.subr.mxu0 0.0
        %351 = vmatpush1.msra.mxu0 0.0
        %352 = vmatprep.subr.mxu0 0.0
        %353 = vmatpush1.msra.mxu0 0.0
        %354 = vmatprep.mubr.f32.mxu0 0.0
        %355 = vmatmul.mubr.f32.gmra.mrb[0].mxu0 %v288
        %v356 = vpop.f32.mrb[0].mxu0
        %v357 = vadd.f32 %v284, %v356
        %v358 = vpop.f32.mrb[0].mxu0
        %359 = vdwg.mxu0
        %v360 = vmul.f32 %v357, 0.5
        %v361 = vmul.f32 %v357, 0.70710677
        %v362 = verf.f32.pop %v361
        %v363 = vadd.f32 %v362, 1.0
        %v364 = vmul.f32 %v360, %v363
        %v365 = vld [vmem:[%s3] sm:$0xff]
        %v366 = vld [vmem:[%s3 + $0x8] sm:$0xff]
        %v367 = vld [vmem:[%s3 + $0x10] sm:$0xff]
        %v368 = vld [vmem:[%s3 + $0x18] sm:$0xff]
        %v369 = vld [vmem:[%s3 + $0x20] sm:$0xff]
        %v370 = vld [vmem:[%s3 + $0x28] sm:$0xff]
        %v371 = vld [vmem:[%s3 + $0x30] sm:$0xff]
        %v372 = vld [vmem:[%s3 + $0x38] sm:$0xff]
        %v373 = vld [vmem:[%s4] sm:$0x1]
        %v375 = vlaneseq
        %v376 = vshrl.u32 %v375, 7
        %v377 = vsub.s32 0, %v376
        %v378 = vrot.slane %v373, %v377
        %vm380 = vcmask 523264
        %v382 = vsel %vm380, %v364, 0
        %384 = vmatprep.subr.mxu0 0.0
        %385 = vmatpush1.msra.mxu0 %v365
        %386 = vmatprep.subr.mxu0 0.0
        %387 = vmatpush1.msra.mxu0 %v366
        %388 = vmatprep.subr.mxu0 0.0
        %389 = vmatpush1.msra.mxu0 %v367
        %390 = vmatprep.subr.mxu0 0.0
        %391 = vmatpush1.msra.mxu0 %v368
        %392 = vmatprep.subr.mxu0 0.0
        %393 = vmatpush1.msra.mxu0 %v369
        %394 = vmatprep.subr.mxu0 0.0
        %395 = vmatpush1.msra.mxu0 %v370
        %396 = vmatprep.subr.mxu0 0.0
        %397 = vmatpush1.msra.mxu0 %v371
        %398 = vmatprep.subr.mxu0 0.0
        %399 = vmatpush1.msra.mxu0 %v372
        %400 = vmatprep.subr.mxu0 0.0
        %401 = vmatpush1.msra.mxu0 0.0
        %402 = vmatprep.subr.mxu0 0.0
        %403 = vmatpush1.msra.mxu0 0.0
        %404 = vmatprep.subr.mxu0 0.0
        %405 = vmatpush1.msra.mxu0 0.0
        %406 = vmatprep.subr.mxu0 0.0
        %407 = vmatpush1.msra.mxu0 0.0
        %408 = vmatprep.subr.mxu0 0.0
        %409 = vmatpush1.msra.mxu0 0.0
        %410 = vmatprep.subr.mxu0 0.0
        %411 = vmatpush1.msra.mxu0 0.0
        %412 = vmatprep.subr.mxu0 0.0
        %413 = vmatpush1.msra.mxu0 0.0
        %414 = vmatprep.subr.mxu0 0.0
        %415 = vmatpush1.msra.mxu0 0.0
        %416 = vmatprep.subr.mxu0 0.0
        %417 = vmatpush1.msra.mxu0 0.0
        %418 = vmatprep.subr.mxu0 0.0
        %419 = vmatpush1.msra.mxu0 0.0
        %420 = vmatprep.subr.mxu0 0.0
        %421 = vmatpush1.msra.mxu0 0.0
        %422 = vmatprep.subr.mxu0 0.0
        %423 = vmatpush1.msra.mxu0 0.0
        %424 = vmatprep.subr.mxu0 0.0
        %425 = vmatpush1.msra.mxu0 0.0
        %426 = vmatprep.subr.mxu0 0.0
        %427 = vmatpush1.msra.mxu0 0.0
        %428 = vmatprep.subr.mxu0 0.0
        %429 = vmatpush1.msra.mxu0 0.0
        %430 = vmatprep.subr.mxu0 0.0
        %431 = vmatpush1.msra.mxu0 0.0
        %432 = vmatprep.subr.mxu0 0.0
        %433 = vmatpush1.msra.mxu0 0.0
        %434 = vmatprep.subr.mxu0 0.0
        %435 = vmatpush1.msra.mxu0 0.0
        %436 = vmatprep.subr.mxu0 0.0
        %437 = vmatpush1.msra.mxu0 0.0
        %438 = vmatprep.subr.mxu0 0.0
        %439 = vmatpush1.msra.mxu0 0.0
        %440 = vmatprep.subr.mxu0 0.0
        %441 = vmatpush1.msra.mxu0 0.0
        %442 = vmatprep.subr.mxu0 0.0
        %443 = vmatpush1.msra.mxu0 0.0
        %444 = vmatprep.subr.mxu0 0.0
        %445 = vmatpush1.msra.mxu0 0.0
        %446 = vmatprep.subr.mxu0 0.0
        %447 = vmatpush1.msra.mxu0 0.0
        %448 = vmatprep.mubr.f32.mxu0 0.0
        %449 = vmatmul.mubr.f32.gmra.mrb[0].mxu0 %v382
        %v450 = vpop.f32.mrb[0].mxu0
        %v451 = vadd.f32 %v378, %v450
        %v452 = vpop.f32.mrb[0].mxu0
        %453 = vdwg.mxu0
        %v454 = vadd.f32 %v274, %v451
        %v455 = vsel %vm286, %v454, 0.0
        %456 = vadd.xlane.f32.xlu0 %v455
        %v457 = vpop.xlane.xlu0 %456
        %v458 = vmul.f32 %v457, 0.03125
        %v459 = vmul.f32 %v454, %v454
        %v460 = vsel %vm286, %v459, 0.0
        %461 = vadd.xlane.f32.xlu0 %v460
        %v462 = vpop.xlane.xlu0 %461
        %v463 = vmul.f32 %v462, 0.03125
        %v464 = vmul.f32 %v458, %v458
        %v465 = vsub.f32 %v463, %v464
        %v466 = vsub.f32 %v454, %v458
        %v467 = vadd.f32 %v465, 1e-05
        %v468 = vrsqrt.pop %v467
        %v469 = vmul.f32 %v466, %v468
        %v470 = vld [vmem:[%s5] sm:$0x1]
        %v472 = vlaneseq
        %v473 = vshrl.u32 %v472, 7
        %v474 = vsub.s32 0, %v473
        %v475 = vrot.slane %v470, %v474
        %v477 = vmul.f32 %v469, %v475
        %v478 = vld [vmem:[%s6] sm:$0x1]
        %v480 = vlaneseq
        %v481 = vshrl.u32 %v480, 7
        %v482 = vsub.s32 0, %v481
        %v483 = vrot.slane %v478, %v482
        %v485 = vadd.f32 %v477, %v483
        %486 = vst.msk [vmem:[%s269] sm:$0xff] %vm286, %v485
        %s487 = sand.u32 %s181, 1
        %s488 = scalar_lea.sflag [#allocation3], %s487
        %s489 = sand.u32 %s181, 1
        %s490 = smul.addr %s489, 8
        %s491 = scalar_lea.vmem [#allocation2], %s490
        // Predicated region
        $region49: #{tpu_custom_call.1} parent=47 // pred_check
          %p492 = pneg %p191
        $region50: #{tpu_custom_call.1} parent=47 // pred_check_branch
          %494 = sbr.rel (%p492) target = $region52
        $region51: #{tpu_custom_call.1} parent=47 // pred_region
          %s496 = ssub.s32 128, 128
          %497 = vsyncadd %s488, %s496
          %s498 = smul.addr %s21, 128
          %s499 = scalar_lea.hbm %s7, %s498
          %s501 = sshll.u32 %s491, 4
          %s502 = int_to_ptr.vmem [resolvable:$true] %s501
          %504 = dma.vmem_to_hbm [thread:$0]  %s502, 128, %s499, %s488
        $region52: #{tpu_custom_call.1} parent=47 // pred_fallthru
          _
      $region48: #{tpu_custom_call.1} parent=5 // pred_fallthru
        _
      %p505 = scmp.le.s32.totalorder 2, %s16
      // Predicated region
      $region53: #{tpu_custom_call.1} parent=5 // pred_check
        %p506 = pneg %p505
      $region54: #{tpu_custom_call.1} parent=5 // pred_check_branch
        %508 = sbr.rel (%p506) target = $region56
      $region55: #{tpu_custom_call.1} parent=5 // pred_region
        %s509 = ssub.s32 %s16, 2
        // Predicated region
        $region57: #{tpu_custom_call.1} parent=55 // pred_check
          %p510 = pneg %p197
        $region58: #{tpu_custom_call.1} parent=55 // pred_check_branch
          %512 = sbr.rel (%p510) target = $region60
        $region59: #{tpu_custom_call.1} parent=55 // pred_region
          %s513 = sand.u32 %s182, 1
          %s514 = scalar_lea.sflag [#allocation3], %s513
          %s515 = sand.u32 %s182, 1
          %s516 = smul.addr %s515, 8
          %s517 = scalar_lea.vmem [#allocation2], %s516
          %518 = dma.done %s514, 128
        $region60: #{tpu_custom_call.1} parent=55 // pred_fallthru
          _
      $region56: #{tpu_custom_call.1} parent=5 // pred_fallthru
        _
    $region6: #{tpu_custom_call.1} parent=1 // loop_footer
      %s20 = sadd.s32 1, %s16
    $region7: #{tpu_custom_call.1} parent=1 // loop_footer_branch
      %15 = sbr.rel target = $region3
    $region8: #{tpu_custom_call.1} parent=1 // loop_exit
      _
    %519 = vsyncpa [#allocation3], 1
    %s520 = scalar_lea.sflag [#allocation3], 1
    %521 = vsyncpa %s520, 1

// kernel: tpu_custom_call.1
$region0: #{tpu_custom_call.1}
  #allocation0 [shape = 'u32[]', space=smem, size = 0x4, offset = 0x4, fixed_abs, tag = 'smem constant byte address 0x4 - core index']
  #allocation1 [shape = 'u32[144,128]{1,0:T(1,128)}', space=vmem, size = 0x12000, scoped, tag = 'internal scratch']
  %s0 = inlined_call_operand.vmem [shape: f32[16,32], index: 0, kind: input, shape index: {}]
  %s1 = inlined_call_operand.vmem [shape: f32[32,64], index: 1, kind: input, shape index: {}]
  %s2 = inlined_call_operand.vmem [shape: f32[1,64], index: 2, kind: input, shape index: {}]
  %s3 = inlined_call_operand.vmem [shape: f32[64,32], index: 3, kind: input, shape index: {}]
  %s4 = inlined_call_operand.vmem [shape: f32[1,32], index: 4, kind: input, shape index: {}]
  %s5 = inlined_call_operand.vmem [shape: f32[1,32], index: 5, kind: input, shape index: {}]
  %s6 = inlined_call_operand.vmem [shape: f32[1,32], index: 6, kind: input, shape index: {}]
  %s7 = inlined_call_operand.hbm [shape: f32[16,32], index: 7, kind: output, shape index: {}]
  %s8 = sld [smem:[#allocation0]]
  $region61: #{tpu_custom_call.1} parent=0
    _
  %s10 = ssub.s32 1, %s8
  %s11 = scalar_select 0, %s10, %s8
  $region1: #{tpu_custom_call.1} parent=0
    #allocation2 [shape = 'u8[8192]{0}', space=vmem, size = 0x2000, scoped, tag = 'output window, operand 0']
    #allocation3 [shape = 's32[2]{0}', space=sflag, size = 0x8, scoped, tag = 'scoped memory for tpu_custom_call.1']
    %12 = vsyncpa [#allocation3], 0
    %s13 = scalar_lea.sflag [#allocation3], 1
    %14 = vsyncpa %s13, 0
    loop: start=0, step=1, limit=4
    $region2: #{tpu_custom_call.1} parent=1 // loop_pre_header
      _
    $region3: #{tpu_custom_call.1} parent=1 // loop_header
      %s16 = sphi 0, %s20
      %p17 = scmp.ge.s32.totalorder %s16, 4
      %s26 = sphi 0, %s28
      %s29 = sphi 0, %s26
      %s30 = sphi 0, %s29
      %s46 = sphi 0, %s30
      %s50 = sphi 0, %s50
      %s52 = sphi 0, %s50
      %s53 = sphi 0, %s52
      %s67 = sphi 0, %s53
      %s71 = sphi 0, %s71
      %s73 = sphi 0, %s71
      %s74 = sphi 0, %s73
      %s88 = sphi 0, %s74
      %s92 = sphi 0, %s92
      %s94 = sphi 0, %s92
      %s95 = sphi 0, %s94
      %s109 = sphi 0, %s95
      %s113 = sphi 0, %s113
      %s115 = sphi 0, %s113
      %s116 = sphi 0, %s115
      %s130 = sphi 0, %s116
      %s134 = sphi 0, %s134
      %s136 = sphi 0, %s134
      %s137 = sphi 0, %s136
      %s151 = sphi 0, %s137
      %s155 = sphi 0, %s155
      %s157 = sphi 0, %s155
      %s158 = sphi 0, %s157
      %s172 = sphi 0, %s158
      %s178 = sphi 0, %s180
      %s181 = sphi 0, %s178
      %s182 = sphi 0, %s181
      %s198 = sphi 0, %s182
    $region4: #{tpu_custom_call.1} parent=1 // loop_header_branch
      %19 = sbr.rel (%p17) target = $region8
    $region5: #{tpu_custom_call.1} parent=1 // loop_body
      %s21 = ssub.s32 %s16, 1
      %s22 = ssub.s32 %s16, 2
      %s23 = sadd.s32 %s16, 1
      %s24 = ssub.s32 %s16, %s23
      %p25 = scmp.eq.s32.totalorder %s24, 0
      %s27 = sadd.s32 %s26, 1
      %s28 = scalar_select %p25, %s26, %s27
      %p31 = pneg %p25
      %p32 = scmp.eq.s32.totalorder %s16, 1
      %p33 = por %p31, %p32
      %p34 = scmp.ne.s32.totalorder %s26, %s29
      %p35 = scmp.eq.s32.totalorder %s16, 0
      %p36 = por %p34, %p35
      %p37 = scmp.ne.s32.totalorder %s26, %s29
      %p38 = scmp.eq.s32.totalorder %s21, 1
      %p39 = por %p37, %p38
      %p40 = scmp.ne.s32.totalorder %s29, %s30
      %p41 = scmp.eq.s32.totalorder %s21, 0
      %p42 = por %p40, %p41
      %p43 = scmp.ne.s32.totalorder %s29, %s30
      %p44 = scmp.eq.s32.totalorder %s22, 1
      %p45 = por %p43, %p44
      %p47 = scmp.ne.s32.totalorder %s30, %s46
      %p48 = scmp.eq.s32.totalorder %s22, 0
      %p49 = por %p47, %p48
      %s51 = sadd.s32 %s50, 1
      %p54 = scmp.eq.s32.totalorder %s16, 1
      %p55 = scmp.ne.s32.totalorder %s50, %s52
      %p56 = scmp.eq.s32.totalorder %s16, 0
      %p57 = por %p55, %p56
      %p58 = scmp.ne.s32.totalorder %s50, %s52
      %p59 = scmp.eq.s32.totalorder %s21, 1
      %p60 = por %p58, %p59
      %p61 = scmp.ne.s32.totalorder %s52, %s53
      %p62 = scmp.eq.s32.totalorder %s21, 0
      %p63 = por %p61, %p62
      %p64 = scmp.ne.s32.totalorder %s52, %s53
      %p65 = scmp.eq.s32.totalorder %s22, 1
      %p66 = por %p64, %p65
      %p68 = scmp.ne.s32.totalorder %s53, %s67
      %p69 = scmp.eq.s32.totalorder %s22, 0
      %p70 = por %p68, %p69
      %s72 = sadd.s32 %s71, 1
      %p75 = scmp.eq.s32.totalorder %s16, 1
      %p76 = scmp.ne.s32.totalorder %s71, %s73
      %p77 = scmp.eq.s32.totalorder %s16, 0
      %p78 = por %p76, %p77
      %p79 = scmp.ne.s32.totalorder %s71, %s73
      %p80 = scmp.eq.s32.totalorder %s21, 1
      %p81 = por %p79, %p80
      %p82 = scmp.ne.s32.totalorder %s73, %s74
      %p83 = scmp.eq.s32.totalorder %s21, 0
      %p84 = por %p82, %p83
      %p85 = scmp.ne.s32.totalorder %s73, %s74
      %p86 = scmp.eq.s32.totalorder %s22, 1
      %p87 = por %p85, %p86
      %p89 = scmp.ne.s32.totalorder %s74, %s88
      %p90 = scmp.eq.s32.totalorder %s22, 0
      %p91 = por %p89, %p90
      %s93 = sadd.s32 %s92, 1
      %p96 = scmp.eq.s32.totalorder %s16, 1
      %p97 = scmp.ne.s32.totalorder %s92, %s94
      %p98 = scmp.eq.s32.totalorder %s16, 0
      %p99 = por %p97, %p98
      %p100 = scmp.ne.s32.totalorder %s92, %s94
      %p101 = scmp.eq.s32.totalorder %s21, 1
      %p102 = por %p100, %p101
      %p103 = scmp.ne.s32.totalorder %s94, %s95
      %p104 = scmp.eq.s32.totalorder %s21, 0
      %p105 = por %p103, %p104
      %p106 = scmp.ne.s32.totalorder %s94, %s95
      %p107 = scmp.eq.s32.totalorder %s22, 1
      %p108 = por %p106, %p107
      %p110 = scmp.ne.s32.totalorder %s95, %s109
      %p111 = scmp.eq.s32.totalorder %s22, 0
      %p112 = por %p110, %p111
      %s114 = sadd.s32 %s113, 1
      %p117 = scmp.eq.s32.totalorder %s16, 1
      %p118 = scmp.ne.s32.totalorder %s113, %s115
      %p119 = scmp.eq.s32.totalorder %s16, 0
      %p120 = por %p118, %p119
      %p121 = scmp.ne.s32.totalorder %s113, %s115
      %p122 = scmp.eq.s32.totalorder %s21, 1
      %p123 = por %p121, %p122
      %p124 = scmp.ne.s32.totalorder %s115, %s116
      %p125 = scmp.eq.s32.totalorder %s21, 0
      %p126 = por %p124, %p125
      %p127 = scmp.ne.s32.totalorder %s115, %s116
      %p128 = scmp.eq.s32.totalorder %s22, 1
      %p129 = por %p127, %p128
      %p131 = scmp.ne.s32.totalorder %s116, %s130
      %p132 = scmp.eq.s32.totalorder %s22, 0
      %p133 = por %p131, %p132
      %s135 = sadd.s32 %s134, 1
      %p138 = scmp.eq.s32.totalorder %s16, 1
      %p139 = scmp.ne.s32.totalorder %s134, %s136
      %p140 = scmp.eq.s32.totalorder %s16, 0
      %p141 = por %p139, %p140
      %p142 = scmp.ne.s32.totalorder %s134, %s136
      %p143 = scmp.eq.s32.totalorder %s21, 1
      %p144 = por %p142, %p143
      %p145 = scmp.ne.s32.totalorder %s136, %s137
      %p146 = scmp.eq.s32.totalorder %s21, 0
      %p147 = por %p145, %p146
      %p148 = scmp.ne.s32.totalorder %s136, %s137
      %p149 = scmp.eq.s32.totalorder %s22, 1
      %p150 = por %p148, %p149
      %p152 = scmp.ne.s32.totalorder %s137, %s151
      %p153 = scmp.eq.s32.totalorder %s22, 0
      %p154 = por %p152, %p153
      %s156 = sadd.s32 %s155, 1
      %p159 = scmp.eq.s32.totalorder %s16, 1
      %p160 = scmp.ne.s32.totalorder %s155, %s157
      %p161 = scmp.eq.s32.totalorder %s16, 0
      %p162 = por %p160, %p161
      %p163 = scmp.ne.s32.totalorder %s155, %s157
      %p164 = scmp.eq.s32.totalorder %s21, 1
      %p165 = por %p163, %p164
      %p166 = scmp.ne.s32.totalorder %s157, %s158
      %p167 = scmp.eq.s32.totalorder %s21, 0
      %p168 = por %p166, %p167
      %p169 = scmp.ne.s32.totalorder %s157, %s158
      %p170 = scmp.eq.s32.totalorder %s22, 1
      %p171 = por %p169, %p170
      %p173 = scmp.ne.s32.totalorder %s158, %s172
      %p174 = scmp.eq.s32.totalorder %s22, 0
      %p175 = por %p173, %p174
      %s176 = ssub.s32 %s16, %s23
      %p177 = scmp.eq.s32.totalorder %s176, 0
      %s179 = sadd.s32 %s178, 1
      %s180 = scalar_select %p177, %s178, %s179
      %p183 = pneg %p177
      %p184 = scmp.eq.s32.totalorder %s16, 1
      %p185 = por %p183, %p184
      %p186 = scmp.ne.s32.totalorder %s178, %s181
      %p187 = scmp.eq.s32.totalorder %s16, 0
      %p188 = por %p186, %p187
      %p189 = scmp.ne.s32.totalorder %s178, %s181
      %p190 = scmp.eq.s32.totalorder %s21, 1
      %p191 = por %p189, %p190
      %p192 = scmp.ne.s32.totalorder %s181, %s182
      %p193 = scmp.eq.s32.totalorder %s21, 0
      %p194 = por %p192, %p193
      %p195 = scmp.ne.s32.totalorder %s181, %s182
      %p196 = scmp.eq.s32.totalorder %s22, 1
      %p197 = por %p195, %p196
      %p199 = scmp.ne.s32.totalorder %s182, %s198
      %p200 = scmp.eq.s32.totalorder %s22, 0
      %p201 = por %p199, %p200
      %p202 = scmp.le.s32.totalorder 1, %s16
      %p203 = scmp.lt.s32.totalorder %s16, 3
      %p204 = pnand %p202, %p203
      %p205 = pneg %p204
      // Predicated region
      $region9: #{tpu_custom_call.1} parent=5 // pred_check
        _
      $region10: #{tpu_custom_call.1} parent=5 // pred_check_branch
        %207 = sbr.rel (%p204) target = $region12
      $region11: #{tpu_custom_call.1} parent=5 // pred_region
        %s208 = ssub.s32 %s16, 1
        // Predicated region
        $region13: #{tpu_custom_call.1} parent=11 // pred_check
          %p209 = pneg %p63
        $region14: #{tpu_custom_call.1} parent=11 // pred_check_branch
          %211 = sbr.rel (%p209) target = $region16
        $region15: #{tpu_custom_call.1} parent=11 // pred_region
          _
        $region16: #{tpu_custom_call.1} parent=11 // pred_fallthru
          _
        // Predicated region
        $region17: #{tpu_custom_call.1} parent=11 // pred_check
          %p212 = pneg %p84
        $region18: #{tpu_custom_call.1} parent=11 // pred_check_branch
          %214 = sbr.rel (%p212) target = $region20
        $region19: #{tpu_custom_call.1} parent=11 // pred_region
          _
        $region20: #{tpu_custom_call.1} parent=11 // pred_fallthru
          _
        // Predicated region
        $region21: #{tpu_custom_call.1} parent=11 // pred_check
          %p215 = pneg %p105
        $region22: #{tpu_custom_call.1} parent=11 // pred_check_branch
          %217 = sbr.rel (%p215) target = $region24
        $region23: #{tpu_custom_call.1} parent=11 // pred_region
          _
        $region24: #{tpu_custom_call.1} parent=11 // pred_fallthru
          _
        // Predicated region
        $region25: #{tpu_custom_call.1} parent=11 // pred_check
          %p218 = pneg %p126
        $region26: #{tpu_custom_call.1} parent=11 // pred_check_branch
          %220 = sbr.rel (%p218) target = $region28
        $region27: #{tpu_custom_call.1} parent=11 // pred_region
          _
        $region28: #{tpu_custom_call.1} parent=11 // pred_fallthru
          _
        // Predicated region
        $region29: #{tpu_custom_call.1} parent=11 // pred_check
          %p221 = pneg %p147
        $region30: #{tpu_custom_call.1} parent=11 // pred_check_branch
          %223 = sbr.rel (%p221) target = $region32
        $region31: #{tpu_custom_call.1} parent=11 // pred_region
          _
        $region32: #{tpu_custom_call.1} parent=11 // pred_fallthru
          _
        // Predicated region
        $region33: #{tpu_custom_call.1} parent=11 // pred_check
          %p224 = pneg %p168
        $region34: #{tpu_custom_call.1} parent=11 // pred_check_branch
          %226 = sbr.rel (%p224) target = $region36
        $region35: #{tpu_custom_call.1} parent=11 // pred_region
          _
        $region36: #{tpu_custom_call.1} parent=11 // pred_fallthru
          _
      $region12: #{tpu_custom_call.1} parent=5 // pred_fallthru
        _
      %p227 = scmp.lt.s32.totalorder %s16, 2
      // Predicated region
      $region37: #{tpu_custom_call.1} parent=5 // pred_check
        %p228 = pneg %p227
      $region38: #{tpu_custom_call.1} parent=5 // pred_check_branch
        %230 = sbr.rel (%p228) target = $region40
      $region39: #{tpu_custom_call.1} parent=5 // pred_region
        // Predicated region
        $region41: #{tpu_custom_call.1} parent=39 // pred_check
          %p231 = pneg %p36
        $region42: #{tpu_custom_call.1} parent=39 // pred_check_branch
          %233 = sbr.rel (%p231) target = $region44
        $region43: #{tpu_custom_call.1} parent=39 // pred_region
          %p234 = scmp.lt.s32.totalorder %s16, 1
          %s235 = scalar_select %p234, %s16, 1
          %s236 = smul.addr %s235, 8
          %s237 = scalar_lea.vmem %s0, %s236
        $region44: #{tpu_custom_call.1} parent=39 // pred_fallthru
          _
      $region40: #{tpu_custom_call.1} parent=5 // pred_fallthru
        _
      %p238 = scmp.le.s32.totalorder 1, %s16
      %p239 = scmp.lt.s32.totalorder %s16, 3
      %p240 = pnand %p238, %p239
      %p241 = pneg %p240
      // Predicated region
      $region45: #{tpu_custom_call.1} parent=5 // pred_check
        _
      $region46: #{tpu_custom_call.1} parent=5 // pred_check_branch
        %243 = sbr.rel (%p240) target = $region48
      $region47: #{tpu_custom_call.1} parent=5 // pred_region
        %s244 = ssub.s32 %s16, 1
        %p245 = scmp.lt.s32.totalorder %s21, 1
        %s246 = scalar_select %p245, %s21, 1
        %s247 = smul.addr %s246, 8
        %s248 = scalar_lea.vmem %s0, %s247
        %p249 = pneg %p42
        %p250 = pneg %p39
        %p251 = pneg %p63
        %p252 = pneg %p60
        %p253 = pneg %p84
        %p254 = pneg %p81
        %p255 = pneg %p105
        %p256 = pneg %p102
        %p257 = pneg %p126
        %p258 = pneg %p123
        %p259 = pneg %p147
        %p260 = pneg %p144
        %p261 = pneg %p168
        %p262 = pneg %p165
        %p263 = pneg %p194
        %p264 = pneg %p191
        %s265 = sand.u32 %s181, 1
        %s266 = scalar_lea.sflag [#allocation3], %s265
        %s267 = sand.u32 %s181, 1
        %s268 = smul.addr %s267, 8
        %s269 = scalar_lea.vmem [#allocation2], %s268
        %p270 = scmp.lt.s32.totalorder %s21, 1
        %s271 = scalar_select %p270, %s21, 1
        %s272 = smul.addr %s271, 8
        %s273 = scalar_lea.vmem %s0, %s272
        %v274 = vld [vmem:[%s273] sm:$0xff]
        %v275 = vld [vmem:[%s1] sm:$0xff]
        %v276 = vld [vmem:[%s1 + $0x8] sm:$0xff]
        %v277 = vld [vmem:[%s1 + $0x10] sm:$0xff]
        %v278 = vld [vmem:[%s1 + $0x18] sm:$0xff]
        %v279 = vld [vmem:[%s2] sm:$0x1]
        %v281 = vlaneseq
        %v282 = vshrl.u32 %v281, 7
        %v283 = vsub.s32 0, %v282
        %v284 = vrot.slane %v279, %v283
        %vm286 = vcmask 261120
        %v288 = vsel %vm286, %v274, 0
        %290 = vmatprep.subr.mxu0 0.0
        %291 = vmatpush1.msra.mxu0 %v275
        %292 = vmatprep.subr.mxu0 0.0
        %293 = vmatpush1.msra.mxu0 %v276
        %294 = vmatprep.subr.mxu0 0.0
        %295 = vmatpush1.msra.mxu0 %v277
        %296 = vmatprep.subr.mxu0 0.0
        %297 = vmatpush1.msra.mxu0 %v278
        %298 = vmatprep.subr.mxu0 0.0
        %299 = vmatpush1.msra.mxu0 0.0
        %300 = vmatprep.subr.mxu0 0.0
        %301 = vmatpush1.msra.mxu0 0.0
        %302 = vmatprep.subr.mxu0 0.0
        %303 = vmatpush1.msra.mxu0 0.0
        %304 = vmatprep.subr.mxu0 0.0
        %305 = vmatpush1.msra.mxu0 0.0
        %306 = vmatprep.subr.mxu0 0.0
        %307 = vmatpush1.msra.mxu0 0.0
        %308 = vmatprep.subr.mxu0 0.0
        %309 = vmatpush1.msra.mxu0 0.0
        %310 = vmatprep.subr.mxu0 0.0
        %311 = vmatpush1.msra.mxu0 0.0
        %312 = vmatprep.subr.mxu0 0.0
        %313 = vmatpush1.msra.mxu0 0.0
        %314 = vmatprep.subr.mxu0 0.0
        %315 = vmatpush1.msra.mxu0 0.0
        %316 = vmatprep.subr.mxu0 0.0
        %317 = vmatpush1.msra.mxu0 0.0
        %318 = vmatprep.subr.mxu0 0.0
        %319 = vmatpush1.msra.mxu0 0.0
        %320 = vmatprep.subr.mxu0 0.0
        %321 = vmatpush1.msra.mxu0 0.0
        %322 = vmatprep.subr.mxu0 0.0
        %323 = vmatpush1.msra.mxu0 0.0
        %324 = vmatprep.subr.mxu0 0.0
        %325 = vmatpush1.msra.mxu0 0.0
        %326 = vmatprep.subr.mxu0 0.0
        %327 = vmatpush1.msra.mxu0 0.0
        %328 = vmatprep.subr.mxu0 0.0
        %329 = vmatpush1.msra.mxu0 0.0
        %330 = vmatprep.subr.mxu0 0.0
        %331 = vmatpush1.msra.mxu0 0.0
        %332 = vmatprep.subr.mxu0 0.0
        %333 = vmatpush1.msra.mxu0 0.0
        %334 = vmatprep.subr.mxu0 0.0
        %335 = vmatpush1.msra.mxu0 0.0
        %336 = vmatprep.subr.mxu0 0.0
        %337 = vmatpush1.msra.mxu0 0.0
        %338 = vmatprep.subr.mxu0 0.0
        %339 = vmatpush1.msra.mxu0 0.0
        %340 = vmatprep.subr.mxu0 0.0
        %341 = vmatpush1.msra.mxu0 0.0
        %342 = vmatprep.subr.mxu0 0.0
        %343 = vmatpush1.msra.mxu0 0.0
        %344 = vmatprep.subr.mxu0 0.0
        %345 = vmatpush1.msra.mxu0 0.0
        %346 = vmatprep.subr.mxu0 0.0
        %347 = vmatpush1.msra.mxu0 0.0
        %348 = vmatprep.subr.mxu0 0.0
        %349 = vmatpush1.msra.mxu0 0.0
        %350 = vmatprep.subr.mxu0 0.0
        %351 = vmatpush1.msra.mxu0 0.0
        %352 = vmatprep.subr.mxu0 0.0
        %353 = vmatpush1.msra.mxu0 0.0
        %354 = vmatprep.mubr.f32.mxu0 0.0
        %355 = vmatmul.mubr.f32.gmra.mrb[0].mxu0 %v288
        %v356 = vpop.f32.mrb[0].mxu0
        %v357 = vadd.f32 %v284, %v356
        %v358 = vpop.f32.mrb[0].mxu0
        %359 = vdwg.mxu0
        %v360 = vmul.f32 %v357, 0.5
        %v361 = vmul.f32 %v357, 0.70710677
        %v362 = verf.f32.pop %v361
        %v363 = vadd.f32 %v362, 1.0
        %v364 = vmul.f32 %v360, %v363
        %v365 = vld [vmem:[%s3] sm:$0xff]
        %v366 = vld [vmem:[%s3 + $0x8] sm:$0xff]
        %v367 = vld [vmem:[%s3 + $0x10] sm:$0xff]
        %v368 = vld [vmem:[%s3 + $0x18] sm:$0xff]
        %v369 = vld [vmem:[%s3 + $0x20] sm:$0xff]
        %v370 = vld [vmem:[%s3 + $0x28] sm:$0xff]
        %v371 = vld [vmem:[%s3 + $0x30] sm:$0xff]
        %v372 = vld [vmem:[%s3 + $0x38] sm:$0xff]
        %v373 = vld [vmem:[%s4] sm:$0x1]
        %v375 = vlaneseq
        %v376 = vshrl.u32 %v375, 7
        %v377 = vsub.s32 0, %v376
        %v378 = vrot.slane %v373, %v377
        %vm380 = vcmask 523264
        %v382 = vsel %vm380, %v364, 0
        %384 = vmatprep.subr.mxu0 0.0
        %385 = vmatpush1.msra.mxu0 %v365
        %386 = vmatprep.subr.mxu0 0.0
        %387 = vmatpush1.msra.mxu0 %v366
        %388 = vmatprep.subr.mxu0 0.0
        %389 = vmatpush1.msra.mxu0 %v367
        %390 = vmatprep.subr.mxu0 0.0
        %391 = vmatpush1.msra.mxu0 %v368
        %392 = vmatprep.subr.mxu0 0.0
        %393 = vmatpush1.msra.mxu0 %v369
        %394 = vmatprep.subr.mxu0 0.0
        %395 = vmatpush1.msra.mxu0 %v370
        %396 = vmatprep.subr.mxu0 0.0
        %397 = vmatpush1.msra.mxu0 %v371
        %398 = vmatprep.subr.mxu0 0.0
        %399 = vmatpush1.msra.mxu0 %v372
        %400 = vmatprep.subr.mxu0 0.0
        %401 = vmatpush1.msra.mxu0 0.0
        %402 = vmatprep.subr.mxu0 0.0
        %403 = vmatpush1.msra.mxu0 0.0
        %404 = vmatprep.subr.mxu0 0.0
        %405 = vmatpush1.msra.mxu0 0.0
        %406 = vmatprep.subr.mxu0 0.0
        %407 = vmatpush1.msra.mxu0 0.0
        %408 = vmatprep.subr.mxu0 0.0
        %409 = vmatpush1.msra.mxu0 0.0
        %410 = vmatprep.subr.mxu0 0.0
        %411 = vmatpush1.msra.mxu0 0.0
        %412 = vmatprep.subr.mxu0 0.0
        %413 = vmatpush1.msra.mxu0 0.0
        %414 = vmatprep.subr.mxu0 0.0
        %415 = vmatpush1.msra.mxu0 0.0
        %416 = vmatprep.subr.mxu0 0.0
        %417 = vmatpush1.msra.mxu0 0.0
        %418 = vmatprep.subr.mxu0 0.0
        %419 = vmatpush1.msra.mxu0 0.0
        %420 = vmatprep.subr.mxu0 0.0
        %421 = vmatpush1.msra.mxu0 0.0
        %422 = vmatprep.subr.mxu0 0.0
        %423 = vmatpush1.msra.mxu0 0.0
        %424 = vmatprep.subr.mxu0 0.0
        %425 = vmatpush1.msra.mxu0 0.0
        %426 = vmatprep.subr.mxu0 0.0
        %427 = vmatpush1.msra.mxu0 0.0
        %428 = vmatprep.subr.mxu0 0.0
        %429 = vmatpush1.msra.mxu0 0.0
        %430 = vmatprep.subr.mxu0 0.0
        %431 = vmatpush1.msra.mxu0 0.0
        %432 = vmatprep.subr.mxu0 0.0
        %433 = vmatpush1.msra.mxu0 0.0
        %434 = vmatprep.subr.mxu0 0.0
        %435 = vmatpush1.msra.mxu0 0.0
        %436 = vmatprep.subr.mxu0 0.0
        %437 = vmatpush1.msra.mxu0 0.0
        %438 = vmatprep.subr.mxu0 0.0
        %439 = vmatpush1.msra.mxu0 0.0
        %440 = vmatprep.subr.mxu0 0.0
        %441 = vmatpush1.msra.mxu0 0.0
        %442 = vmatprep.subr.mxu0 0.0
        %443 = vmatpush1.msra.mxu0 0.0
        %444 = vmatprep.subr.mxu0 0.0
        %445 = vmatpush1.msra.mxu0 0.0
        %446 = vmatprep.subr.mxu0 0.0
        %447 = vmatpush1.msra.mxu0 0.0
        %448 = vmatprep.mubr.f32.mxu0 0.0
        %449 = vmatmul.mubr.f32.gmra.mrb[0].mxu0 %v382
        %v450 = vpop.f32.mrb[0].mxu0
        %v451 = vadd.f32 %v378, %v450
        %v452 = vpop.f32.mrb[0].mxu0
        %453 = vdwg.mxu0
        %v454 = vadd.f32 %v274, %v451
        %v455 = vsel %vm286, %v454, 0.0
        %456 = vadd.xlane.f32.xlu0 %v455
        %v457 = vpop.xlane.xlu0 %456
        %v458 = vmul.f32 %v457, 0.03125
        %v459 = vmul.f32 %v454, %v454
        %v460 = vsel %vm286, %v459, 0.0
        %461 = vadd.xlane.f32.xlu0 %v460
        %v462 = vpop.xlane.xlu0 %461
        %v463 = vmul.f32 %v462, 0.03125
        %v464 = vmul.f32 %v458, %v458
        %v465 = vsub.f32 %v463, %v464
        %v466 = vsub.f32 %v454, %v458
        %v467 = vadd.f32 %v465, 1e-05
        %v468 = vrsqrt.pop %v467
        %v469 = vmul.f32 %v466, %v468
        %v470 = vld [vmem:[%s5] sm:$0x1]
        %v472 = vlaneseq
        %v473 = vshrl.u32 %v472, 7
        %v474 = vsub.s32 0, %v473
        %v475 = vrot.slane %v470, %v474
        %v477 = vmul.f32 %v469, %v475
        %v478 = vld [vmem:[%s6] sm:$0x1]
        %v480 = vlaneseq
        %v481 = vshrl.u32 %v480, 7
        %v482 = vsub.s32 0, %v481
        %v483 = vrot.slane %v478, %v482
        %v485 = vadd.f32 %v477, %v483
        %486 = vst.msk [vmem:[%s269] sm:$0xff] %vm286, %v485
        %s487 = sand.u32 %s181, 1
        %s488 = scalar_lea.sflag [#allocation3], %s487
        %s489 = sand.u32 %s181, 1
        %s490 = smul.addr %s489, 8
        %s491 = scalar_lea.vmem [#allocation2], %s490
        // Predicated region
        $region49: #{tpu_custom_call.1} parent=47 // pred_check
          %p492 = pneg %p191
        $region50: #{tpu_custom_call.1} parent=47 // pred_check_branch
          %494 = sbr.rel (%p492) target = $region52
        $region51: #{tpu_custom_call.1} parent=47 // pred_region
          %s496 = ssub.s32 128, 128
          %497 = vsyncadd %s488, %s496
          %s498 = smul.addr %s21, 128
          %s499 = scalar_lea.hbm %s7, %s498
          %s501 = sshll.u32 %s491, 4
          %s502 = int_to_ptr.vmem [resolvable:$true] %s501
          %504 = dma.vmem_to_hbm [thread:$0]  %s502, 128, %s499, %s488
        $region52: #{tpu_custom_call.1} parent=47 // pred_fallthru
          _
      $region48: #{tpu_custom_call.1} parent=5 // pred_fallthru
        _
      %p505 = scmp.le.s32.totalorder 2, %s16
      // Predicated region
      $region53: #{tpu_custom_call.1} parent=5 // pred_check
        %p506 = pneg %p505
      $region54: #{tpu_custom_call.1} parent=5 // pred_check_branch
        %508 = sbr.rel (%p506) target = $region56
      $region55: #{tpu_custom_call.1} parent=5 // pred_region
        %s509 = ssub.s32 %s16, 2
        // Predicated region
        $region57: #{tpu_custom_call.1} parent=55 // pred_check
          %p510 = pneg %p197
        $region58: #{tpu_custom_call.1} parent=55 // pred_check_branch
          %512 = sbr.rel (%p510) target = $region60
        $region59: #{tpu_custom_call.1} parent=55 // pred_region
          %s513 = sand.u32 %s182, 1
          %s514 = scalar_lea.sflag [#allocation3], %s513
          %s515 = sand.u32 %s182, 1
          %s516 = smul.addr %s515, 8
          %s517 = scalar_lea.vmem [#allocation2], %s516
          %518 = dma.done %s514, 128
        $region60: #{tpu_custom_call.1} parent=55 // pred_fallthru
          _
      $region56: #{tpu_custom_call.1} parent=5 // pred_fallthru
        _
    $region6: #{tpu_custom_call.1} parent=1 // loop_footer
      %s20 = sadd.s32 1, %s16
    $region7: #{tpu_custom_call.1} parent=1 // loop_footer_branch
      %15 = sbr.rel target = $region3
    $region8: #{tpu_custom_call.1} parent=1 // loop_exit
      _
    %519 = vsyncpa [#allocation3], 1
    %s520 = scalar_lea.sflag [#allocation3], 1
    %521 = vsyncpa %s520, 1

</llo_original>
